<compile_context>
chip_gen: v7x
topology: tpu7x:2x2x1
jax: 0.10.0
libtpu: 0.0.40
codegen_flags: <defaults>
</compile_context>

<pallas_src>
import jax
import jax.numpy as jnp
from jax.experimental import pallas as pl
from jax.experimental.pallas import tpu as pltpu


def _conv1d_same_kernel(x_ref, w_ref, b_ref, o_ref):
    """1-D 'same' convolution (cross-correlation) for a TB-element batch tile.

    x_ref: (TB, 1, L)       unpadded input signals (L on the lane axis)
    w_ref: (K, C_out, L)    tap weights pre-broadcast along L (resident)
    b_ref: (C_out, L)       bias pre-broadcast along L (resident)
    o_ref: (TB, C_out, L)   output
    """
    tb = x_ref.shape[0]
    k_size, c_out, l = w_ref.shape
    pad = (k_size - 1) // 2

    x = x_ref[...]                                              # (TB, 1, L) f32
    # Lane-position index, hoisted once per step (used by the boundary masks).
    t_idx = jax.lax.broadcasted_iota(jnp.int32, (1, 1, l), 2)

    # Bias folded into the accumulator init from the resident (C_out, L) slab.
    acc = jnp.broadcast_to(b_ref[...][None], (tb, c_out, l)).astype(jnp.float32)

    # Statically unrolled taps: lane-rotate the signal (XLU), zero the wrapped
    # lanes (VPU select), multiply-add against the pre-broadcast tap weights.
    for k in range(k_size):
        d = k - pad                                 # tap offset in [-pad, pad]
        if d == 0:
            xt = x
        else:
            # xt[..., t] = x[..., (t + d) % L]
            xt = pltpu.roll(x, shift=(-d) % l, axis=2)
            if d > 0:
                xt = jnp.where(t_idx < l - d, xt, 0.0)
            else:
                xt = jnp.where(t_idx >= -d, xt, 0.0)
        # (TB, 1, L) * (1, C_out, L) -> (TB, C_out, L) : pure VPU FMAs.
        acc = acc + xt * w_ref[k][None]

    o_ref[...] = acc.astype(o_ref.dtype)


def patch_embedding(x, weight, bias, *, batch_tile=128):
    """out[n, c, t] = bias[c] + sum_k weight[c, 0, k] * x[n, 0, t + k - pad].

    x:      (N, 1, L)      float32
    weight: (C_out, 1, K)  float32  (PyTorch Conv1d layout)
    bias:   (C_out,)       float32
    returns (N, C_out, L)
    """
    n, c_in, l = x.shape
    c_out, c_in_w, k_size = weight.shape
    assert c_in == 1 and c_in_w == 1, "PatchEmbedding uses a 1-channel input"
    assert k_size % 2 == 1, "'same' padding (K-1)//2 requires an odd kernel size"

    # Grid-invariant broadcasts hoisted out of the kernel (stay VMEM-resident).
    w_b = jnp.broadcast_to(weight[:, 0, :].T[:, :, None],
                           (k_size, c_out, l))                  # (K, C_out, L)
    b_b = jnp.broadcast_to(bias[:, None], (c_out, l))           # (C_out, L)

    # Batch tile: whole batch for small N (single step), capped at 128 so the
    # double-buffered working set fits every generation's default scoped VMEM
    # and large N still yields >= 2 tiles for v7x's two TensorCores.
    tb = n if n <= batch_tile else batch_tile
    grid = (pl.cdiv(n, tb),)

    return pl.pallas_call(
        _conv1d_same_kernel,
        out_shape=jax.ShapeDtypeStruct((n, c_out, l), x.dtype),
        grid_spec=pltpu.PrefetchScalarGridSpec(
            num_scalar_prefetch=0,
            grid=grid,
            in_specs=[
                pl.BlockSpec((tb, 1, l), lambda i: (i, 0, 0)),
                pl.BlockSpec((k_size, c_out, l), lambda i: (0, 0, 0)),  # resident
                pl.BlockSpec((c_out, l), lambda i: (0, 0)),             # resident
            ],
            out_specs=pl.BlockSpec((tb, c_out, l), lambda i: (i, 0, 0)),
        ),
        compiler_params=pltpu.CompilerParams(
            dimension_semantics=("parallel",)),
    )(x, w_b, b_b)


if __name__ == "__main__":
    key = jax.random.PRNGKey(0)
    kx, kw, kb = jax.random.split(key, 3)

    C_OUT, K, L = 32, 7, 128          # emb_size=32, kernel=7, padding=3

    w = jax.random.normal(kw, (C_OUT, 1, K), dtype=jnp.float32) * 0.1
    b = jax.random.normal(kb, (C_OUT,), dtype=jnp.float32) * 0.1

    # Pure-JAX reference: PyTorch Conv1d == cross-correlation, padding=3.
    def ref_conv(xin):
        return jax.lax.conv_general_dilated(
            xin, w, window_strides=(1,), padding=((K // 2, K // 2),),
            dimension_numbers=("NCH", "OIH", "NCH"),
        ) + b[None, :, None]

    # Small shape implied by the module (single grid step over the batch).
    x_small = jax.random.normal(kx, (2, 1, L), dtype=jnp.float32)
    out_small = jax.block_until_ready(patch_embedding(x_small, w, b))
    assert out_small.shape == (2, C_OUT, L) and out_small.dtype == x_small.dtype
    assert jnp.allclose(out_small, ref_conv(x_small), atol=1e-5, rtol=1e-5)

    # Larger batch exercising the multi-tile grid / "parallel" batch axis.
    x_big = jax.random.normal(kx, (256, 1, L), dtype=jnp.float32)
    out_big = jax.block_until_ready(patch_embedding(x_big, w, b))
    assert out_big.shape == (256, C_OUT, L)
    assert jnp.allclose(out_big, ref_conv(x_big), atol=1e-5, rtol=1e-5)

    print("KERNEL_OK")
</pallas_src>

<mosaic_0001>
module attributes {stable_mosaic.version = 11 : i64} {
  func.func @_conv1d_same_kernel(%arg0: i32, %arg1: memref<2x1x128xf32, #tpu.memory_space<vmem>>, %arg2: memref<7x32x128xf32, #tpu.memory_space<vmem>>, %arg3: memref<32x128xf32, #tpu.memory_space<vmem>>, %arg4: memref<2x32x128xf32, #tpu.memory_space<vmem>>) attributes {dimension_semantics = [#tpu.dimension_semantics<parallel>], iteration_bounds = array<i64: 1>, scalar_prefetch = 0 : i64, scratch_operands = 0 : i64, tpu.core_type = #tpu.core_type<tc>, window_params = [{transform_indices = @transform_0, window_bounds = array<i64: 2, 1, 128>}, {pipeline_mode = #tpu.pipeline_mode<synchronous>, transform_indices = @transform_1, window_bounds = array<i64: 7, 32, 128>}, {pipeline_mode = #tpu.pipeline_mode<synchronous>, transform_indices = @transform_2, window_bounds = array<i64: 32, 128>}, {transform_indices = @transform_3, window_bounds = array<i64: 2, 32, 128>}]} {
    %c0 = arith.constant 0 : index
    %c0_0 = arith.constant 0 : index
    %c0_1 = arith.constant 0 : index
    %0 = vector.load %arg1[%c0, %c0_0, %c0_1] : memref<2x1x128xf32, #tpu.memory_space<vmem>>, vector<2x1x128xf32>
    %1 = tpu.iota {dimensions = array<i32: 2>} : vector<1x1x128xi32>
    %c0_2 = arith.constant 0 : index
    %c0_3 = arith.constant 0 : index
    %2 = vector.load %arg3[%c0_2, %c0_3] : memref<32x128xf32, #tpu.memory_space<vmem>>, vector<32x128xf32>
    %3 = vector.shape_cast %2 : vector<32x128xf32> to vector<1x32x128xf32>
    %4 = vector.shape_cast %3 : vector<1x32x128xf32> to vector<1x32x128xf32>
    %5 = vector.broadcast %4 : vector<1x32x128xf32> to vector<2x32x128xf32>
    %c3_i32 = arith.constant 3 : i32
    %6 = tpu.dynamic_rotate %0 by %c3_i32 dim 2 : vector<2x1x128xf32>, i32 -> vector<2x1x128xf32>
    %c3_i32_4 = arith.constant 3 : i32
    %7 = vector.broadcast %c3_i32_4 : i32 to vector<1x1x128xi32>
    %8 = arith.cmpi sge, %1, %7 : vector<1x1x128xi32>
    %cst = arith.constant 0.000000e+00 : f32
    %9 = vector.shape_cast %8 : vector<1x1x128xi1> to vector<1x1x128xi1>
    %10 = vector.broadcast %9 : vector<1x1x128xi1> to vector<2x1x128xi1>
    %11 = vector.broadcast %cst : f32 to vector<2x1x128xf32>
    %12 = arith.select %10, %6, %11 : vector<2x1x128xi1>, vector<2x1x128xf32>
    %c0_5 = arith.constant 0 : index
    %c0_6 = arith.constant 0 : index
    %c0_7 = arith.constant 0 : index
    %13 = vector.load %arg2[%c0_5, %c0_6, %c0_7] : memref<7x32x128xf32, #tpu.memory_space<vmem>>, vector<1x32x128xf32>
    %14 = vector.shape_cast %13 : vector<1x32x128xf32> to vector<32x128xf32>
    %15 = vector.shape_cast %14 : vector<32x128xf32> to vector<1x32x128xf32>
    %16 = vector.broadcast %12 : vector<2x1x128xf32> to vector<2x32x128xf32>
    %17 = vector.broadcast %15 : vector<1x32x128xf32> to vector<2x32x128xf32>
    %18 = arith.mulf %16, %17 : vector<2x32x128xf32>
    %19 = arith.addf %5, %18 : vector<2x32x128xf32>
    %c2_i32 = arith.constant 2 : i32
    %20 = tpu.dynamic_rotate %0 by %c2_i32 dim 2 : vector<2x1x128xf32>, i32 -> vector<2x1x128xf32>
    %c2_i32_8 = arith.constant 2 : i32
    %21 = vector.broadcast %c2_i32_8 : i32 to vector<1x1x128xi32>
    %22 = arith.cmpi sge, %1, %21 : vector<1x1x128xi32>
    %cst_9 = arith.constant 0.000000e+00 : f32
    %23 = vector.shape_cast %22 : vector<1x1x128xi1> to vector<1x1x128xi1>
    %24 = vector.broadcast %23 : vector<1x1x128xi1> to vector<2x1x128xi1>
    %25 = vector.broadcast %cst_9 : f32 to vector<2x1x128xf32>
    %26 = arith.select %24, %20, %25 : vector<2x1x128xi1>, vector<2x1x128xf32>
    %c1 = arith.constant 1 : index
    %c0_10 = arith.constant 0 : index
    %c0_11 = arith.constant 0 : index
    %27 = vector.load %arg2[%c1, %c0_10, %c0_11] : memref<7x32x128xf32, #tpu.memory_space<vmem>>, vector<1x32x128xf32>
    %28 = vector.shape_cast %27 : vector<1x32x128xf32> to vector<32x128xf32>
    %29 = vector.shape_cast %28 : vector<32x128xf32> to vector<1x32x128xf32>
    %30 = vector.broadcast %26 : vector<2x1x128xf32> to vector<2x32x128xf32>
    %31 = vector.broadcast %29 : vector<1x32x128xf32> to vector<2x32x128xf32>
    %32 = arith.mulf %30, %31 : vector<2x32x128xf32>
    %33 = arith.addf %19, %32 : vector<2x32x128xf32>
    %c1_i32 = arith.constant 1 : i32
    %34 = tpu.dynamic_rotate %0 by %c1_i32 dim 2 : vector<2x1x128xf32>, i32 -> vector<2x1x128xf32>
    %c1_i32_12 = arith.constant 1 : i32
    %35 = vector.broadcast %c1_i32_12 : i32 to vector<1x1x128xi32>
    %36 = arith.cmpi sge, %1, %35 : vector<1x1x128xi32>
    %cst_13 = arith.constant 0.000000e+00 : f32
    %37 = vector.shape_cast %36 : vector<1x1x128xi1> to vector<1x1x128xi1>
    %38 = vector.broadcast %37 : vector<1x1x128xi1> to vector<2x1x128xi1>
    %39 = vector.broadcast %cst_13 : f32 to vector<2x1x128xf32>
    %40 = arith.select %38, %34, %39 : vector<2x1x128xi1>, vector<2x1x128xf32>
    %c2 = arith.constant 2 : index
    %c0_14 = arith.constant 0 : index
    %c0_15 = arith.constant 0 : index
    %41 = vector.load %arg2[%c2, %c0_14, %c0_15] : memref<7x32x128xf32, #tpu.memory_space<vmem>>, vector<1x32x128xf32>
    %42 = vector.shape_cast %41 : vector<1x32x128xf32> to vector<32x128xf32>
    %43 = vector.shape_cast %42 : vector<32x128xf32> to vector<1x32x128xf32>
    %44 = vector.broadcast %40 : vector<2x1x128xf32> to vector<2x32x128xf32>
    %45 = vector.broadcast %43 : vector<1x32x128xf32> to vector<2x32x128xf32>
    %46 = arith.mulf %44, %45 : vector<2x32x128xf32>
    %47 = arith.addf %33, %46 : vector<2x32x128xf32>
    %c3 = arith.constant 3 : index
    %c0_16 = arith.constant 0 : index
    %c0_17 = arith.constant 0 : index
    %48 = vector.load %arg2[%c3, %c0_16, %c0_17] : memref<7x32x128xf32, #tpu.memory_space<vmem>>, vector<1x32x128xf32>
    %49 = vector.shape_cast %48 : vector<1x32x128xf32> to vector<32x128xf32>
    %50 = vector.shape_cast %49 : vector<32x128xf32> to vector<1x32x128xf32>
    %51 = vector.broadcast %0 : vector<2x1x128xf32> to vector<2x32x128xf32>
    %52 = vector.broadcast %50 : vector<1x32x128xf32> to vector<2x32x128xf32>
    %53 = arith.mulf %51, %52 : vector<2x32x128xf32>
    %54 = arith.addf %47, %53 : vector<2x32x128xf32>
    %c127_i32 = arith.constant 127 : i32
    %55 = tpu.dynamic_rotate %0 by %c127_i32 dim 2 : vector<2x1x128xf32>, i32 -> vector<2x1x128xf32>
    %c127_i32_18 = arith.constant 127 : i32
    %56 = vector.broadcast %c127_i32_18 : i32 to vector<1x1x128xi32>
    %57 = arith.cmpi slt, %1, %56 : vector<1x1x128xi32>
    %cst_19 = arith.constant 0.000000e+00 : f32
    %58 = vector.shape_cast %57 : vector<1x1x128xi1> to vector<1x1x128xi1>
    %59 = vector.broadcast %58 : vector<1x1x128xi1> to vector<2x1x128xi1>
    %60 = vector.broadcast %cst_19 : f32 to vector<2x1x128xf32>
    %61 = arith.select %59, %55, %60 : vector<2x1x128xi1>, vector<2x1x128xf32>
    %c4 = arith.constant 4 : index
    %c0_20 = arith.constant 0 : index
    %c0_21 = arith.constant 0 : index
    %62 = vector.load %arg2[%c4, %c0_20, %c0_21] : memref<7x32x128xf32, #tpu.memory_space<vmem>>, vector<1x32x128xf32>
    %63 = vector.shape_cast %62 : vector<1x32x128xf32> to vector<32x128xf32>
    %64 = vector.shape_cast %63 : vector<32x128xf32> to vector<1x32x128xf32>
    %65 = vector.broadcast %61 : vector<2x1x128xf32> to vector<2x32x128xf32>
    %66 = vector.broadcast %64 : vector<1x32x128xf32> to vector<2x32x128xf32>
    %67 = arith.mulf %65, %66 : vector<2x32x128xf32>
    %68 = arith.addf %54, %67 : vector<2x32x128xf32>
    %c126_i32 = arith.constant 126 : i32
    %69 = tpu.dynamic_rotate %0 by %c126_i32 dim 2 : vector<2x1x128xf32>, i32 -> vector<2x1x128xf32>
    %c126_i32_22 = arith.constant 126 : i32
    %70 = vector.broadcast %c126_i32_22 : i32 to vector<1x1x128xi32>
    %71 = arith.cmpi slt, %1, %70 : vector<1x1x128xi32>
    %cst_23 = arith.constant 0.000000e+00 : f32
    %72 = vector.shape_cast %71 : vector<1x1x128xi1> to vector<1x1x128xi1>
    %73 = vector.broadcast %72 : vector<1x1x128xi1> to vector<2x1x128xi1>
    %74 = vector.broadcast %cst_23 : f32 to vector<2x1x128xf32>
    %75 = arith.select %73, %69, %74 : vector<2x1x128xi1>, vector<2x1x128xf32>
    %c5 = arith.constant 5 : index
    %c0_24 = arith.constant 0 : index
    %c0_25 = arith.constant 0 : index
    %76 = vector.load %arg2[%c5, %c0_24, %c0_25] : memref<7x32x128xf32, #tpu.memory_space<vmem>>, vector<1x32x128xf32>
    %77 = vector.shape_cast %76 : vector<1x32x128xf32> to vector<32x128xf32>
    %78 = vector.shape_cast %77 : vector<32x128xf32> to vector<1x32x128xf32>
    %79 = vector.broadcast %75 : vector<2x1x128xf32> to vector<2x32x128xf32>
    %80 = vector.broadcast %78 : vector<1x32x128xf32> to vector<2x32x128xf32>
    %81 = arith.mulf %79, %80 : vector<2x32x128xf32>
    %82 = arith.addf %68, %81 : vector<2x32x128xf32>
    %c125_i32 = arith.constant 125 : i32
    %83 = tpu.dynamic_rotate %0 by %c125_i32 dim 2 : vector<2x1x128xf32>, i32 -> vector<2x1x128xf32>
    %c125_i32_26 = arith.constant 125 : i32
    %84 = vector.broadcast %c125_i32_26 : i32 to vector<1x1x128xi32>
    %85 = arith.cmpi slt, %1, %84 : vector<1x1x128xi32>
    %cst_27 = arith.constant 0.000000e+00 : f32
    %86 = vector.shape_cast %85 : vector<1x1x128xi1> to vector<1x1x128xi1>
    %87 = vector.broadcast %86 : vector<1x1x128xi1> to vector<2x1x128xi1>
    %88 = vector.broadcast %cst_27 : f32 to vector<2x1x128xf32>
    %89 = arith.select %87, %83, %88 : vector<2x1x128xi1>, vector<2x1x128xf32>
    %c6 = arith.constant 6 : index
    %c0_28 = arith.constant 0 : index
    %c0_29 = arith.constant 0 : index
    %90 = vector.load %arg2[%c6, %c0_28, %c0_29] : memref<7x32x128xf32, #tpu.memory_space<vmem>>, vector<1x32x128xf32>
    %91 = vector.shape_cast %90 : vector<1x32x128xf32> to vector<32x128xf32>
    %92 = vector.shape_cast %91 : vector<32x128xf32> to vector<1x32x128xf32>
    %93 = vector.broadcast %89 : vector<2x1x128xf32> to vector<2x32x128xf32>
    %94 = vector.broadcast %92 : vector<1x32x128xf32> to vector<2x32x128xf32>
    %95 = arith.mulf %93, %94 : vector<2x32x128xf32>
    %96 = arith.addf %82, %95 : vector<2x32x128xf32>
    %c0_30 = arith.constant 0 : index
    %c0_31 = arith.constant 0 : index
    %c0_32 = arith.constant 0 : index
    %97 = vector.load %arg4[%c0_30, %c0_31, %c0_32] : memref<2x32x128xf32, #tpu.memory_space<vmem>>, vector<2x32x128xf32>
    tpu.vector_store %arg4[%c0_30, %c0_31, %c0_32], %96 {strides = array<i32>} : memref<2x32x128xf32, #tpu.memory_space<vmem>>, vector<2x32x128xf32>,
    return
  }
  func.func @transform_0(%arg0: i32) -> (i32, i32, i32) {
    %c0_i32 = arith.constant 0 : i32
    %c0_i32_0 = arith.constant 0 : i32
    %c0_i32_1 = arith.constant 0 : i32
    return %arg0, %c0_i32, %c0_i32_0 : i32, i32, i32
  }
  func.func @transform_1(%arg0: i32) -> (i32, i32, i32) {
    %c0_i32 = arith.constant 0 : i32
    %c0_i32_0 = arith.constant 0 : i32
    %c0_i32_1 = arith.constant 0 : i32
    %c0_i32_2 = arith.constant 0 : i32
    return %c0_i32, %c0_i32_0, %c0_i32_1 : i32, i32, i32
  }
  func.func @transform_2(%arg0: i32) -> (i32, i32) {
    %c0_i32 = arith.constant 0 : i32
    %c0_i32_0 = arith.constant 0 : i32
    %c0_i32_1 = arith.constant 0 : i32
    return %c0_i32, %c0_i32_0 : i32, i32
  }
  func.func @transform_3(%arg0: i32) -> (i32, i32, i32) {
    %c0_i32 = arith.constant 0 : i32
    %c0_i32_0 = arith.constant 0 : i32
    %c0_i32_1 = arith.constant 0 : i32
    return %arg0, %c0_i32, %c0_i32_0 : i32, i32, i32
  }
}

</mosaic_0001>

<llo_original>
// kernel: tpu_custom_call.1
$region0: #{tpu_custom_call.1}
  #allocation0 [shape = 'u32[]', space=smem, size = 0x4, offset = 0x4, fixed_abs, tag = 'smem constant byte address 0x4 - core index']
  #allocation1 [shape = 'u32[144,128]{1,0:T(1,128)}', space=vmem, size = 0x12000, scoped, tag = 'internal scratch']
  %s0 = inlined_call_operand.hbm [shape: f32[2,1,128], index: 0, kind: input, shape index: {}]
  %s1 = inlined_call_operand.hbm [shape: f32[7,32,128], index: 1, kind: input, shape index: {}]
  %s2 = inlined_call_operand.hbm [shape: f32[32,128], index: 2, kind: input, shape index: {}]
  %s3 = inlined_call_operand.hbm [shape: f32[2,32,128], index: 3, kind: output, shape index: {}]
  %s4 = sld [smem:[#allocation0]]
  $region34: #{tpu_custom_call.1} parent=0
    _
  %s6 = ssub.s32 1, %s4
  %s7 = scalar_select 0, %s6, %s4
  $region1: #{tpu_custom_call.1} parent=0
    #allocation2 [shape = 'u8[1024]{0}', space=vmem, size = 0x400, scoped, tag = 'input window, operand 0, single buffered']
    #allocation3 [shape = 's32[1]{0}', space=sflag, size = 0x4, scoped, tag = 'scoped memory for tpu_custom_call.1']
    #allocation4 [shape = 's32[1]{0}', space=sflag, size = 0x4, scoped, tag = 'scoped memory for tpu_custom_call.1']
    #allocation5 [shape = 'u8[114688]{0}', space=vmem, size = 0x1c000, scoped, tag = 'input window, operand 1, single buffered']
    #allocation6 [shape = 's32[1]{0}', space=sflag, size = 0x4, scoped, tag = 'scoped memory for tpu_custom_call.1']
    #allocation7 [shape = 'u8[16384]{0}', space=vmem, size = 0x4000, scoped, tag = 'input window, operand 2, single buffered']
    #allocation8 [shape = 'u8[32768]{0}', space=vmem, size = 0x8000, scoped, tag = 'output window, operand 0, single buffered']
    %8 = vsyncpa [#allocation3], 0
    %9 = vsyncpa [#allocation6], 0
    %10 = vsyncpa [#allocation4], 0
    // Predicated region
    $region2: #{tpu_custom_call.1} parent=1 // pred_check
      _
    $region3: #{tpu_custom_call.1} parent=1 // pred_check_branch
      %12 = sbr.rel (0) target = $region5
    $region4: #{tpu_custom_call.1} parent=1 // pred_region
      %s14 = ssub.s32 32, 32
      %15 = vsyncadd [#allocation3], %s14
      %s16 = sshll.u32 [#allocation2], 4
      %s17 = int_to_ptr.vmem [resolvable:$true] %s16
      %22 = dma.hbm_to_vmem [thread:$0]  %s0, 32, %s17, [#allocation3], 16, 16, 1
    $region5: #{tpu_custom_call.1} parent=1 // pred_fallthru
      _
    // Predicated region
    $region6: #{tpu_custom_call.1} parent=1 // pred_check
      _
    $region7: #{tpu_custom_call.1} parent=1 // pred_check_branch
      %24 = sbr.rel (0) target = $region9
    $region8: #{tpu_custom_call.1} parent=1 // pred_region
      %s26 = ssub.s32 3584, 3584
      %27 = vsyncadd [#allocation6], %s26
      %s28 = sshll.u32 [#allocation5], 4
      %s29 = int_to_ptr.vmem [resolvable:$true] %s28
      %34 = dma.hbm_to_vmem [thread:$0]  %s1, 3584, %s29, [#allocation6], 128, 128, 8
    $region9: #{tpu_custom_call.1} parent=1 // pred_fallthru
      _
    // Predicated region
    $region10: #{tpu_custom_call.1} parent=1 // pred_check
      _
    $region11: #{tpu_custom_call.1} parent=1 // pred_check_branch
      %36 = sbr.rel (0) target = $region13
    $region12: #{tpu_custom_call.1} parent=1 // pred_region
      %s38 = ssub.s32 512, 512
      %39 = vsyncadd [#allocation6], %s38
      %s40 = sshll.u32 [#allocation7], 4
      %s41 = int_to_ptr.vmem [resolvable:$true] %s40
      %46 = dma.hbm_to_vmem [thread:$0]  %s2, 512, %s41, [#allocation6], 128, 128, 8
    $region13: #{tpu_custom_call.1} parent=1 // pred_fallthru
      _
    // Predicated region
    $region14: #{tpu_custom_call.1} parent=1 // pred_check
      _
    $region15: #{tpu_custom_call.1} parent=1 // pred_check_branch
      %48 = sbr.rel (0) target = $region17
    $region16: #{tpu_custom_call.1} parent=1 // pred_region
      %49 = dma.done [#allocation3], 32
    $region17: #{tpu_custom_call.1} parent=1 // pred_fallthru
      _
    // Predicated region
    $region18: #{tpu_custom_call.1} parent=1 // pred_check
      _
    $region19: #{tpu_custom_call.1} parent=1 // pred_check_branch
      %51 = sbr.rel (0) target = $region21
    $region20: #{tpu_custom_call.1} parent=1 // pred_region
      %52 = dma.done [#allocation6], 3584
    $region21: #{tpu_custom_call.1} parent=1 // pred_fallthru
      _
    // Predicated region
    $region22: #{tpu_custom_call.1} parent=1 // pred_check
      _
    $region23: #{tpu_custom_call.1} parent=1 // pred_check_branch
      %54 = sbr.rel (0) target = $region25
    $region24: #{tpu_custom_call.1} parent=1 // pred_region
      %55 = dma.done [#allocation6], 512
    $region25: #{tpu_custom_call.1} parent=1 // pred_fallthru
      _
    %v56 = vld [vmem:[#allocation2] sm:$0x1]
    %v57 = vld [vmem:[#allocation2 + $0x1] sm:$0x1]
    %v58 = vlaneseq
    %v59 = vand.u32 %v58, 127
    %v60 = vld [vmem:[#allocation7] sm:$0xff]
    %v61 = vld [vmem:[#allocation7 + $0x8] sm:$0xff]
    %v62 = vld [vmem:[#allocation7 + $0x10] sm:$0xff]
    %v63 = vld [vmem:[#allocation7 + $0x18] sm:$0xff]
    %64 = vrot.lane.b32.xlu0 %v56, 3
    %v65 = vpop.permute.xlu0 %64
    %66 = vrot.lane.b32.xlu0 %v57, 3
    %v67 = vpop.permute.xlu0 %66
    %vm68 = vcmp.ge.s32.totalorder %v59, 3
    %v69 = vsel %vm68, 1, 0
    %vm70 = vcmp.eq.s32.totalorder %v69, 1
    %v71 = vsel %vm70, %v65, 0.0
    %v72 = vsel %vm70, %v67, 0.0
    %v73 = vld [vmem:[#allocation5] sm:$0xff]
    %v74 = vld [vmem:[#allocation5 + $0x8] sm:$0xff]
    %v75 = vld [vmem:[#allocation5 + $0x10] sm:$0xff]
    %v76 = vld [vmem:[#allocation5 + $0x18] sm:$0xff]
    %v77 = vlaneseq
    %v78 = vshrl.u32 %v77, 7
    %v79 = vsub.s32 0, %v78
    %v80 = vrot.slane %v71, %v79
    %v81 = vlaneseq
    %v82 = vshrl.u32 %v81, 7
    %v83 = vsub.s32 0, %v82
    %v84 = vrot.slane %v72, %v83
    %v85 = vmul.f32 %v80, %v73
    %v86 = vmul.f32 %v80, %v74
    %v87 = vmul.f32 %v80, %v75
    %v88 = vmul.f32 %v80, %v76
    %v89 = vmul.f32 %v84, %v73
    %v90 = vmul.f32 %v84, %v74
    %v91 = vmul.f32 %v84, %v75
    %v92 = vmul.f32 %v84, %v76
    %v93 = vadd.f32 %v60, %v85
    %v94 = vadd.f32 %v61, %v86
    %v95 = vadd.f32 %v62, %v87
    %v96 = vadd.f32 %v63, %v88
    %v97 = vadd.f32 %v60, %v89
    %v98 = vadd.f32 %v61, %v90
    %v99 = vadd.f32 %v62, %v91
    %v100 = vadd.f32 %v63, %v92
    %101 = vrot.lane.b32.xlu0 %v56, 2
    %v102 = vpop.permute.xlu0 %101
    %103 = vrot.lane.b32.xlu0 %v57, 2
    %v104 = vpop.permute.xlu0 %103
    %vm105 = vcmp.ge.s32.totalorder %v59, 2
    %v106 = vsel %vm105, 1, 0
    %vm107 = vcmp.eq.s32.totalorder %v106, 1
    %v108 = vsel %vm107, %v102, 0.0
    %v109 = vsel %vm107, %v104, 0.0
    %s110 = scalar_lea.vmem [#allocation5], 32
    %v111 = vld [vmem:[%s110] sm:$0xff]
    %v112 = vld [vmem:[%s110 + $0x8] sm:$0xff]
    %v113 = vld [vmem:[%s110 + $0x10] sm:$0xff]
    %v114 = vld [vmem:[%s110 + $0x18] sm:$0xff]
    %v115 = vlaneseq
    %v116 = vshrl.u32 %v115, 7
    %v117 = vsub.s32 0, %v116
    %v118 = vrot.slane %v108, %v117
    %v119 = vlaneseq
    %v120 = vshrl.u32 %v119, 7
    %v121 = vsub.s32 0, %v120
    %v122 = vrot.slane %v109, %v121
    %v123 = vmul.f32 %v118, %v111
    %v124 = vmul.f32 %v118, %v112
    %v125 = vmul.f32 %v118, %v113
    %v126 = vmul.f32 %v118, %v114
    %v127 = vmul.f32 %v122, %v111
    %v128 = vmul.f32 %v122, %v112
    %v129 = vmul.f32 %v122, %v113
    %v130 = vmul.f32 %v122, %v114
    %v131 = vadd.f32 %v93, %v123
    %v132 = vadd.f32 %v94, %v124
    %v133 = vadd.f32 %v95, %v125
    %v134 = vadd.f32 %v96, %v126
    %v135 = vadd.f32 %v97, %v127
    %v136 = vadd.f32 %v98, %v128
    %v137 = vadd.f32 %v99, %v129
    %v138 = vadd.f32 %v100, %v130
    %139 = vrot.lane.b32.xlu0 %v56, 1
    %v140 = vpop.permute.xlu0 %139
    %141 = vrot.lane.b32.xlu0 %v57, 1
    %v142 = vpop.permute.xlu0 %141
    %vm143 = vcmp.ge.s32.totalorder %v59, 1
    %v144 = vsel %vm143, 1, 0
    %vm145 = vcmp.eq.s32.totalorder %v144, 1
    %v146 = vsel %vm145, %v140, 0.0
    %v147 = vsel %vm145, %v142, 0.0
    %s148 = scalar_lea.vmem [#allocation5], 64
    %v149 = vld [vmem:[%s148] sm:$0xff]
    %v150 = vld [vmem:[%s148 + $0x8] sm:$0xff]
    %v151 = vld [vmem:[%s148 + $0x10] sm:$0xff]
    %v152 = vld [vmem:[%s148 + $0x18] sm:$0xff]
    %v153 = vlaneseq
    %v154 = vshrl.u32 %v153, 7
    %v155 = vsub.s32 0, %v154
    %v156 = vrot.slane %v146, %v155
    %v157 = vlaneseq
    %v158 = vshrl.u32 %v157, 7
    %v159 = vsub.s32 0, %v158
    %v160 = vrot.slane %v147, %v159
    %v161 = vmul.f32 %v156, %v149
    %v162 = vmul.f32 %v156, %v150
    %v163 = vmul.f32 %v156, %v151
    %v164 = vmul.f32 %v156, %v152
    %v165 = vmul.f32 %v160, %v149
    %v166 = vmul.f32 %v160, %v150
    %v167 = vmul.f32 %v160, %v151
    %v168 = vmul.f32 %v160, %v152
    %v169 = vadd.f32 %v131, %v161
    %v170 = vadd.f32 %v132, %v162
    %v171 = vadd.f32 %v133, %v163
    %v172 = vadd.f32 %v134, %v164
    %v173 = vadd.f32 %v135, %v165
    %v174 = vadd.f32 %v136, %v166
    %v175 = vadd.f32 %v137, %v167
    %v176 = vadd.f32 %v138, %v168
    %s177 = scalar_lea.vmem [#allocation5], 96
    %v178 = vld [vmem:[%s177] sm:$0xff]
    %v179 = vld [vmem:[%s177 + $0x8] sm:$0xff]
    %v180 = vld [vmem:[%s177 + $0x10] sm:$0xff]
    %v181 = vld [vmem:[%s177 + $0x18] sm:$0xff]
    %v184 = vlaneseq
    %v185 = vshrl.u32 %v184, 7
    %v186 = vsub.s32 0, %v185
    %v187 = vrot.slane %v56, %v186
    %v188 = vlaneseq
    %v189 = vshrl.u32 %v188, 7
    %v190 = vsub.s32 0, %v189
    %v191 = vrot.slane %v57, %v190
    %v194 = vmul.f32 %v187, %v178
    %v195 = vmul.f32 %v187, %v179
    %v196 = vmul.f32 %v187, %v180
    %v197 = vmul.f32 %v187, %v181
    %v198 = vmul.f32 %v191, %v178
    %v199 = vmul.f32 %v191, %v179
    %v200 = vmul.f32 %v191, %v180
    %v201 = vmul.f32 %v191, %v181
    %v202 = vadd.f32 %v169, %v194
    %v203 = vadd.f32 %v170, %v195
    %v204 = vadd.f32 %v171, %v196
    %v205 = vadd.f32 %v172, %v197
    %v206 = vadd.f32 %v173, %v198
    %v207 = vadd.f32 %v174, %v199
    %v208 = vadd.f32 %v175, %v200
    %v209 = vadd.f32 %v176, %v201
    %210 = vrot.lane.b32.xlu0 %v56, 127
    %v211 = vpop.permute.xlu0 %210
    %212 = vrot.lane.b32.xlu0 %v57, 127
    %v213 = vpop.permute.xlu0 %212
    %vm214 = vcmp.lt.s32.totalorder %v59, 127
    %v215 = vsel %vm214, 1, 0
    %vm216 = vcmp.eq.s32.totalorder %v215, 1
    %v217 = vsel %vm216, %v211, 0.0
    %v218 = vsel %vm216, %v213, 0.0
    %s219 = scalar_lea.vmem [#allocation5], 128
    %v220 = vld [vmem:[%s219] sm:$0xff]
    %v221 = vld [vmem:[%s219 + $0x8] sm:$0xff]
    %v222 = vld [vmem:[%s219 + $0x10] sm:$0xff]
    %v223 = vld [vmem:[%s219 + $0x18] sm:$0xff]
    %v224 = vlaneseq
    %v225 = vshrl.u32 %v224, 7
    %v226 = vsub.s32 0, %v225
    %v227 = vrot.slane %v217, %v226
    %v228 = vlaneseq
    %v229 = vshrl.u32 %v228, 7
    %v230 = vsub.s32 0, %v229
    %v231 = vrot.slane %v218, %v230
    %v232 = vmul.f32 %v227, %v220
    %v233 = vmul.f32 %v227, %v221
    %v234 = vmul.f32 %v227, %v222
    %v235 = vmul.f32 %v227, %v223
    %v236 = vmul.f32 %v231, %v220
    %v237 = vmul.f32 %v231, %v221
    %v238 = vmul.f32 %v231, %v222
    %v239 = vmul.f32 %v231, %v223
    %v240 = vadd.f32 %v202, %v232
    %v241 = vadd.f32 %v203, %v233
    %v242 = vadd.f32 %v204, %v234
    %v243 = vadd.f32 %v205, %v235
    %v244 = vadd.f32 %v206, %v236
    %v245 = vadd.f32 %v207, %v237
    %v246 = vadd.f32 %v208, %v238
    %v247 = vadd.f32 %v209, %v239
    %248 = vrot.lane.b32.xlu0 %v56, 126
    %v249 = vpop.permute.xlu0 %248
    %250 = vrot.lane.b32.xlu0 %v57, 126
    %v251 = vpop.permute.xlu0 %250
    %vm252 = vcmp.lt.s32.totalorder %v59, 126
    %v253 = vsel %vm252, 1, 0
    %vm254 = vcmp.eq.s32.totalorder %v253, 1
    %v255 = vsel %vm254, %v249, 0.0
    %v256 = vsel %vm254, %v251, 0.0
    %s257 = scalar_lea.vmem [#allocation5], 160
    %v258 = vld [vmem:[%s257] sm:$0xff]
    %v259 = vld [vmem:[%s257 + $0x8] sm:$0xff]
    %v260 = vld [vmem:[%s257 + $0x10] sm:$0xff]
    %v261 = vld [vmem:[%s257 + $0x18] sm:$0xff]
    %v262 = vlaneseq
    %v263 = vshrl.u32 %v262, 7
    %v264 = vsub.s32 0, %v263
    %v265 = vrot.slane %v255, %v264
    %v266 = vlaneseq
    %v267 = vshrl.u32 %v266, 7
    %v268 = vsub.s32 0, %v267
    %v269 = vrot.slane %v256, %v268
    %v270 = vmul.f32 %v265, %v258
    %v271 = vmul.f32 %v265, %v259
    %v272 = vmul.f32 %v265, %v260
    %v273 = vmul.f32 %v265, %v261
    %v274 = vmul.f32 %v269, %v258
    %v275 = vmul.f32 %v269, %v259
    %v276 = vmul.f32 %v269, %v260
    %v277 = vmul.f32 %v269, %v261
    %v278 = vadd.f32 %v240, %v270
    %v279 = vadd.f32 %v241, %v271
    %v280 = vadd.f32 %v242, %v272
    %v281 = vadd.f32 %v243, %v273
    %v282 = vadd.f32 %v244, %v274
    %v283 = vadd.f32 %v245, %v275
    %v284 = vadd.f32 %v246, %v276
    %v285 = vadd.f32 %v247, %v277
    %286 = vrot.lane.b32.xlu0 %v56, 125
    %v287 = vpop.permute.xlu0 %286
    %288 = vrot.lane.b32.xlu0 %v57, 125
    %v289 = vpop.permute.xlu0 %288
    %vm290 = vcmp.lt.s32.totalorder %v59, 125
    %v291 = vsel %vm290, 1, 0
    %vm292 = vcmp.eq.s32.totalorder %v291, 1
    %v293 = vsel %vm292, %v287, 0.0
    %v294 = vsel %vm292, %v289, 0.0
    %s295 = scalar_lea.vmem [#allocation5], 192
    %v296 = vld [vmem:[%s295] sm:$0xff]
    %v297 = vld [vmem:[%s295 + $0x8] sm:$0xff]
    %v298 = vld [vmem:[%s295 + $0x10] sm:$0xff]
    %v299 = vld [vmem:[%s295 + $0x18] sm:$0xff]
    %v300 = vlaneseq
    %v301 = vshrl.u32 %v300, 7
    %v302 = vsub.s32 0, %v301
    %v303 = vrot.slane %v293, %v302
    %v304 = vlaneseq
    %v305 = vshrl.u32 %v304, 7
    %v306 = vsub.s32 0, %v305
    %v307 = vrot.slane %v294, %v306
    %v308 = vmul.f32 %v303, %v296
    %v309 = vmul.f32 %v303, %v297
    %v310 = vmul.f32 %v303, %v298
    %v311 = vmul.f32 %v303, %v299
    %v312 = vmul.f32 %v307, %v296
    %v313 = vmul.f32 %v307, %v297
    %v314 = vmul.f32 %v307, %v298
    %v315 = vmul.f32 %v307, %v299
    %v316 = vadd.f32 %v278, %v308
    %v317 = vadd.f32 %v279, %v309
    %v318 = vadd.f32 %v280, %v310
    %v319 = vadd.f32 %v281, %v311
    %v320 = vadd.f32 %v282, %v312
    %v321 = vadd.f32 %v283, %v313
    %v322 = vadd.f32 %v284, %v314
    %v323 = vadd.f32 %v285, %v315
    %324 = vst [vmem:[#allocation8] sm:$0xff] %v316
    %325 = vst [vmem:[#allocation8 + $0x8] sm:$0xff] %v317
    %326 = vst [vmem:[#allocation8 + $0x10] sm:$0xff] %v318
    %327 = vst [vmem:[#allocation8 + $0x18] sm:$0xff] %v319
    %328 = vst [vmem:[#allocation8 + $0x20] sm:$0xff] %v320
    %329 = vst [vmem:[#allocation8 + $0x28] sm:$0xff] %v321
    %330 = vst [vmem:[#allocation8 + $0x30] sm:$0xff] %v322
    %331 = vst [vmem:[#allocation8 + $0x38] sm:$0xff] %v323
    // Predicated region
    $region26: #{tpu_custom_call.1} parent=1 // pred_check
      _
    $region27: #{tpu_custom_call.1} parent=1 // pred_check_branch
      %333 = sbr.rel (0) target = $region29
    $region28: #{tpu_custom_call.1} parent=1 // pred_region
      %s335 = ssub.s32 1024, 1024
      %336 = vsyncadd [#allocation4], %s335
      %s337 = sshll.u32 [#allocation8], 4
      %s338 = int_to_ptr.vmem [resolvable:$true] %s337
      %343 = dma.vmem_to_hbm [thread:$0]  %s338, 1024, %s3, [#allocation4], 128, 128, 8
    $region29: #{tpu_custom_call.1} parent=1 // pred_fallthru
      _
    // Predicated region
    $region30: #{tpu_custom_call.1} parent=1 // pred_check
      _
    $region31: #{tpu_custom_call.1} parent=1 // pred_check_branch
      %345 = sbr.rel (0) target = $region33
    $region32: #{tpu_custom_call.1} parent=1 // pred_region
      %346 = dma.done [#allocation4], 1024
    $region33: #{tpu_custom_call.1} parent=1 // pred_fallthru
      _
    %347 = vsyncpa [#allocation3], 1
    %348 = vsyncpa [#allocation6], 1
    %349 = vsyncpa [#allocation4], 1

</llo_original>
